<compile_context>
chip_gen: v6e
topology: v6e:2x2x1
jax: 0.10.0
libtpu: 0.0.40
codegen_flags: <defaults>
</compile_context>

<pallas_src>
import functools
import math

import jax
import jax.numpy as jnp
from jax.experimental import pallas as pl
from jax.experimental.pallas import tpu as pltpu


# ---------------------------------------------------------------------------
# Pallas kernel
# ---------------------------------------------------------------------------
def _pos_embedding_kernel(tab_ref, o_ref, row_ref, *, norm, scale, h, eps,
                          cache_row):
    """Write one (tile_m, tile_f) output tile.

    tab_ref : (4, tile_f) packed per-column tables
              row 0 = x_embed  (= spatial row i + 1, cumsum of ones over h)
              row 1 = y_embed  (= spatial col j + 1, cumsum of ones over w)
              row 2 = dim_t    (= temperature ** (2*(j//2)/h))
              row 3 = phase    (= (j % 2) * pi/2  -> sin(v+phase) interleaves sin/cos)
    o_ref   : (tile_m, tile_f) output tile (identical row repeated over b*c)
    row_ref : (1, tile_f) VMEM scratch holding the computed row
    """
    def compute_row():
        tab = tab_ref[...]
        x_e = tab[0:1, :]
        y_e = tab[1:2, :]
        dim_t = tab[2:3, :]
        phase = tab[3:4, :]
        if norm:
            # x_embed[:, :, -1:] == h (cumsum of ones over the h axis)
            x_e = (x_e - 0.5) / (float(h) + eps) * scale
            # y_embed[:, -1:, :] equals y_embed itself (identical across channels)
            y_e = (y_e - 0.5) / (y_e + eps) * scale
        pos_x = x_e / dim_t
        pos_y = y_e / dim_t
        # even column j -> sin(pos); odd column j -> cos(pos) == sin(pos + pi/2)
        row_ref[...] = jnp.sin(pos_x + phase) + jnp.sin(pos_y + phase)

    if cache_row:
        # Columns outer (parallel), rows inner (arbitrary/sequential): compute
        # the trig row once per column block, reuse for every row block.
        pl.when(pl.program_id(1) == 0)(compute_row)
    else:
        compute_row()

    # Same value for every (b, c) row -> sublane broadcast + full-width stores.
    o_ref[...] = jnp.broadcast_to(row_ref[...], o_ref.shape)


# ---------------------------------------------------------------------------
# Tiling helpers (byte-budget driven)
# ---------------------------------------------------------------------------
_TARGET_TILE_ELEMS = 1 << 20     # ~4 MiB of f32 per output buffer (x2 double-buffered)
_MAX_TILE_F = 8192               # lane-dense column-tile cap


def _pick_col_tile(hw, cap):
    """Largest lane-aligned (multiple-of-128) divisor of hw that is <= cap;
    falls back to the full extent (always a legal last block dim)."""
    cap = min(cap, hw)
    t = cap - cap % 128
    while t >= 128:
        if hw % t == 0:
            return t
        t -= 128
    return hw


def _pick_row_tile(m, cap):
    """Largest sublane-aligned (multiple-of-8) divisor of m that is <= cap;
    falls back to the full extent (always a legal block dim)."""
    cap = max(1, min(cap, m))
    t = cap - cap % 8
    while t >= 8:
        if m % t == 0:
            return t
        t -= 8
    return m


# ---------------------------------------------------------------------------
# Wrapper
# ---------------------------------------------------------------------------
def pos_embedding_forward(x, *, inplane=None, temperature=10000.0,
                          norm=False, scale=None):
    # Replicate the module's constructor checks.
    if scale is not None and norm is False:
        raise ValueError('normalize should be True if scale is passed')
    if scale is None:
        scale = 2 * math.pi
    temperature = float(temperature)

    b, c, h, w = x.shape
    if inplane is not None:
        assert c == inplane
    # The PyTorch code broadcasts a length-h dim_t over the last (w) axis and
    # stacks equal-length even/odd slices -> needs h == w and w even.
    assert h == w and w % 2 == 0

    M = b * c
    HW = h * w

    # ---- packed per-column table (4, HW): tiny index glue; trig stays in-kernel ----
    f = jnp.arange(HW, dtype=jnp.int32)
    i = f // w                                    # spatial row index
    j = f - i * w                                 # spatial col index
    jf = j.astype(jnp.float32)
    x_row = (i + 1).astype(jnp.float32)           # cumsum of ones over h
    y_row = jf + 1.0                              # cumsum of ones over w
    dim_row = temperature ** (2.0 * jnp.floor(jf / 2.0) / h)
    phase_row = (j % 2).astype(jnp.float32) * (math.pi / 2.0)
    table = jnp.stack([x_row, y_row, dim_row, phase_row], axis=0)   # (4, HW) f32

    # ---- byte-budget tiling: lane-dense columns, sublane-aligned rows ----
    tile_f = _pick_col_tile(HW, _MAX_TILE_F)
    tile_m = _pick_row_tile(M, max(1, _TARGET_TILE_ELEMS // tile_f))
    # Safety for awkward shapes (e.g. large odd M forcing tile_m == M):
    while 2 * tile_m * tile_f * 4 > (12 << 20) and tile_f > 128:
        smaller = _pick_col_tile(HW, tile_f // 2)
        if smaller >= tile_f:
            break
        tile_f = smaller

    nf = HW // tile_f
    nm = M // tile_m

    # Columns outer (table DMA + trig happen once per column block), rows
    # inner (pure broadcast-store).  If the column axis collapses to a single
    # block, let the row axis be the parallel one (v7x megacore) and recompute
    # the cheap row each step instead of caching it.
    if nf >= 2 or nm == 1:
        dim_sem = ("parallel", "arbitrary")
        cache_row = nm >= 2
    else:
        dim_sem = ("arbitrary", "parallel")
        cache_row = False

    kernel = functools.partial(_pos_embedding_kernel, norm=norm, scale=scale,
                               h=h, eps=1e-6, cache_row=cache_row)

    out = pl.pallas_call(
        kernel,
        out_shape=jax.ShapeDtypeStruct((M, HW), jnp.float32),
        grid=(nf, nm),
        in_specs=[pl.BlockSpec((4, tile_f), lambda fblk, m: (0, fblk))],
        out_specs=pl.BlockSpec((tile_m, tile_f), lambda fblk, m: (m, fblk)),
        scratch_shapes=[pltpu.VMEM((1, tile_f), jnp.float32)],
        compiler_params=pltpu.CompilerParams(
            dimension_semantics=dim_sem,
            vmem_limit_bytes=32 * 1024 * 1024),
    )(table)

    # TODO(synk): if the consumer tolerates it, emit bf16 (halves the HBM
    # writes, the binding resource) or skip materializing the b*c identical
    # rows entirely and broadcast at the call site; kept f32 / (b,c,h,w) to
    # preserve the module's output contract.
    return out.reshape(b, c, h, w)


# ---------------------------------------------------------------------------
# Pure-JAX reference (mirrors the PyTorch ops) for correctness checks
# ---------------------------------------------------------------------------
def _ref_forward(x, *, temperature=10000.0, norm=False, scale=2 * math.pi):
    b, c, h, w = x.shape
    not_mask = jnp.ones((b, c, h, w), jnp.float32)
    x_embed = jnp.cumsum(not_mask, axis=2)
    y_embed = jnp.cumsum(not_mask, axis=3)
    if norm:
        eps = 1e-6
        x_embed = (x_embed - 0.5) / (x_embed[:, :, -1:, :] + eps) * scale
        y_embed = (y_embed - 0.5) / (y_embed[:, -1:, :, :] + eps) * scale
    dim_t = jnp.arange(h, dtype=jnp.float32)
    dim_t = float(temperature) ** (2.0 * jnp.floor(dim_t / 2.0) / h)
    pos_x = x_embed / dim_t
    pos_y = y_embed / dim_t
    pos_x = jnp.stack((jnp.sin(pos_x[..., 0::2]),
                       jnp.cos(pos_x[..., 1::2])), axis=4).reshape(b, c, h, w)
    pos_y = jnp.stack((jnp.sin(pos_y[..., 0::2]),
                       jnp.cos(pos_y[..., 1::2])), axis=4).reshape(b, c, h, w)
    return pos_x + pos_y


# ---------------------------------------------------------------------------
if __name__ == "__main__":
    # Small shapes consistent with the module (b, c=inplane, h, w); h == w, w even.
    b, inplane, h, w = 2, 4, 16, 16

    key = jax.random.PRNGKey(0)
    x = jax.random.normal(key, (b, inplane, h, w), jnp.float32)

    # Default configuration of the module: norm=False, scale=None.
    out = pos_embedding_forward(x, inplane=inplane, temperature=10000,
                                norm=False, scale=None)
    out = jax.block_until_ready(out)
    assert out.shape == (b, inplane, h, w), out.shape
    ref = jax.block_until_ready(_ref_forward(x, temperature=10000.0, norm=False))
    assert jnp.allclose(out, ref, rtol=1e-4, atol=1e-4), \
        float(jnp.max(jnp.abs(out - ref)))

    # norm=True path (scale defaults to 2*pi, mirroring the module).
    out_n = pos_embedding_forward(x, inplane=inplane, temperature=10000,
                                  norm=True, scale=None)
    out_n = jax.block_until_ready(out_n)
    ref_n = jax.block_until_ready(_ref_forward(x, temperature=10000.0, norm=True,
                                               scale=2 * math.pi))
    assert jnp.allclose(out_n, ref_n, rtol=1e-4, atol=1e-4), \
        float(jnp.max(jnp.abs(out_n - ref_n)))

    print("KERNEL_OK")
</pallas_src>

<mosaic_0001>
module attributes {stable_mosaic.version = 11 : i64} {
  func.func @_pos_embedding_kernel(%arg0: i32, %arg1: i32, %arg2: memref<4x256xf32, #tpu.memory_space<vmem>>, %arg3: memref<8x256xf32, #tpu.memory_space<vmem>>, %arg4: memref<1x256xf32, #tpu.memory_space<vmem>>) attributes {dimension_semantics = [#tpu.dimension_semantics<parallel>, #tpu.dimension_semantics<arbitrary>], iteration_bounds = array<i64: 1, 1>, scalar_prefetch = 0 : i64, scratch_operands = 1 : i64, tpu.core_type = #tpu.core_type<tc>, window_params = [{transform_indices = @transform_0, window_bounds = array<i64: 4, 256>}, {transform_indices = @transform_1, window_bounds = array<i64: 8, 256>}]} {
    %c0 = arith.constant 0 : index
    %c0_0 = arith.constant 0 : index
    %0 = vector.load %arg2[%c0, %c0_0] : memref<4x256xf32, #tpu.memory_space<vmem>>, vector<4x256xf32>
    %1 = vector.extract_strided_slice %0 {offsets = [0, 0], sizes = [1, 256], strides = [1, 1]} : vector<4x256xf32> to vector<1x256xf32>
    %2 = vector.extract_strided_slice %0 {offsets = [1, 0], sizes = [1, 256], strides = [1, 1]} : vector<4x256xf32> to vector<1x256xf32>
    %3 = vector.extract_strided_slice %0 {offsets = [2, 0], sizes = [1, 256], strides = [1, 1]} : vector<4x256xf32> to vector<1x256xf32>
    %4 = vector.extract_strided_slice %0 {offsets = [3, 0], sizes = [1, 256], strides = [1, 1]} : vector<4x256xf32> to vector<1x256xf32>
    %5 = arith.divf %1, %3 : vector<1x256xf32>
    %6 = arith.divf %2, %3 : vector<1x256xf32>
    %7 = arith.addf %5, %4 : vector<1x256xf32>
    %8 = math.sin %7 : vector<1x256xf32>
    %9 = arith.addf %6, %4 : vector<1x256xf32>
    %10 = math.sin %9 : vector<1x256xf32>
    %11 = arith.addf %8, %10 : vector<1x256xf32>
    %c0_1 = arith.constant 0 : index
    %c0_2 = arith.constant 0 : index
    %12 = vector.load %arg4[%c0_1, %c0_2] : memref<1x256xf32, #tpu.memory_space<vmem>>, vector<1x256xf32>
    tpu.vector_store %arg4[%c0_1, %c0_2], %11 {strides = array<i32>} : memref<1x256xf32, #tpu.memory_space<vmem>>, vector<1x256xf32>,
    %c0_3 = arith.constant 0 : index
    %c0_4 = arith.constant 0 : index
    %13 = vector.load %arg4[%c0_3, %c0_4] : memref<1x256xf32, #tpu.memory_space<vmem>>, vector<1x256xf32>
    %14 = vector.shape_cast %13 : vector<1x256xf32> to vector<1x256xf32>
    %15 = vector.broadcast %14 : vector<1x256xf32> to vector<8x256xf32>
    %c0_5 = arith.constant 0 : index
    %c0_6 = arith.constant 0 : index
    %16 = vector.load %arg3[%c0_5, %c0_6] : memref<8x256xf32, #tpu.memory_space<vmem>>, vector<8x256xf32>
    tpu.vector_store %arg3[%c0_5, %c0_6], %15 {strides = array<i32>} : memref<8x256xf32, #tpu.memory_space<vmem>>, vector<8x256xf32>,
    return
  }
  func.func @transform_0(%arg0: i32, %arg1: i32) -> (i32, i32) {
    %c0_i32 = arith.constant 0 : i32
    %c0_i32_0 = arith.constant 0 : i32
    return %c0_i32, %arg0 : i32, i32
  }
  func.func @transform_1(%arg0: i32, %arg1: i32) -> (i32, i32) {
    %c0_i32 = arith.constant 0 : i32
    return %arg1, %arg0 : i32, i32
  }
}

</mosaic_0001>

<llo_original>
// kernel: tpu_custom_call.1
$region0: #{tpu_custom_call.1}
  #allocation0 [shape = 'u32[]', space=smem, size = 0x4, offset = 0x4, fixed_abs, tag = 'smem constant byte address 0x4 - core index']
  #allocation1 [shape = 'u32[144,128]{1,0:T(1,128)}', space=vmem, size = 0x12000, scoped, tag = 'internal scratch']
  #allocation2 [shape = 'f32[1,256]{1,0:T(1,128)}', space=vmem, size = 0x400, scoped, tag = 'scratch operand']
  %s0 = inlined_call_operand.hbm [shape: f32[4,256], index: 0, kind: input, shape index: {}]
  %s1 = inlined_call_operand.hbm [shape: f32[8,256], index: 1, kind: output, shape index: {}]
  %s2 = sld [smem:[#allocation0]]
  $region18: #{tpu_custom_call.1} parent=0
    _
  %s4 = ssub.s32 1, %s2
  %s5 = scalar_select 0, %s4, %s2
  $region1: #{tpu_custom_call.1} parent=0
    #allocation3 [shape = 'u8[4096]{0}', space=vmem, size = 0x1000, scoped, tag = 'input window, operand 0, single buffered']
    #allocation4 [shape = 's32[1]{0}', space=sflag, size = 0x4, scoped, tag = 'scoped memory for tpu_custom_call.1']
    #allocation5 [shape = 's32[1]{0}', space=sflag, size = 0x4, scoped, tag = 'scoped memory for tpu_custom_call.1']
    #allocation6 [shape = 'u8[8192]{0}', space=vmem, size = 0x2000, scoped, tag = 'output window, operand 0, single buffered']
    %6 = vsyncpa [#allocation4], 0
    %7 = vsyncpa [#allocation5], 0
    // Predicated region
    $region2: #{tpu_custom_call.1} parent=1 // pred_check
      _
    $region3: #{tpu_custom_call.1} parent=1 // pred_check_branch
      %9 = sbr.rel (0) target = $region5
    $region4: #{tpu_custom_call.1} parent=1 // pred_region
      %s11 = ssub.s32 128, 128
      %12 = vsyncadd [#allocation4], %s11
      %s14 = sshll.u32 [#allocation3], 4
      %s15 = int_to_ptr.vmem [resolvable:$true] %s14
      %17 = dma.hbm_to_vmem [thread:$0]  %s0, 128, %s15, [#allocation4]
    $region5: #{tpu_custom_call.1} parent=1 // pred_fallthru
      _
    // Predicated region
    $region6: #{tpu_custom_call.1} parent=1 // pred_check
      _
    $region7: #{tpu_custom_call.1} parent=1 // pred_check_branch
      %19 = sbr.rel (0) target = $region9
    $region8: #{tpu_custom_call.1} parent=1 // pred_region
      %20 = dma.done [#allocation4], 128
    $region9: #{tpu_custom_call.1} parent=1 // pred_fallthru
      _
    %v21 = vld [vmem:[#allocation3] sm:$0xff]
    %v23 = vrot.slane %v21, 6
    %v24 = vrot.slane %v23, 4
    %v26 = vrcp.pop %v24
    %v27 = vmul.f32 %v21, %v26
    %v28 = vrot.slane %v21, 5
    %v29 = vrot.slane %v28, 4
    %v31 = vrcp.pop %v29
    %v32 = vmul.f32 %v21, %v31
    %v33 = vrot.slane %v21, 7
    %v34 = vrot.slane %v33, 4
    %v36 = vadd.f32 %v27, %v34
    %v37 = vand.u32 2147483647, %v36
    %vm38 = vcmp.le.f32.partialorder %v37, 0.7853982
    %vm39 = vcmp.lt.s32.totalorder %v36, 0
    %v40 = vand.u32 %v36, 2139095040
    %v41 = vshrl.u32 %v40, 23
    %v42 = vsub.s32 %v41, 127
    %v43 = vand.u32 2147483647, %v36
    %v44 = vand.u32 %v43, 8388607
    %v45 = vor.u32 %v44, 8388608
    %v46 = vsub.s32 0, %v45
    %v47 = vadd.s32 %v42, 1
    %vm48 = vcmp.gt.s32.totalorder %v47, 0
    %v49 = vsel %vm48, %v47, 0
    %v50 = vshrl.u32 %v49, 5
    %v51 = vand.u32 %v49, 31
    %v52 = vsub.s32 32, %v51
    %v53 = vshrl.u32 683565275, %v52
    %v54 = vshll.u32 683565275, %v51
    %v55 = vshrl.u32 2475754826, %v52
    %v56 = vor.u32 %v54, %v55
    %v57 = vshll.u32 2475754826, %v51
    %v58 = vshrl.u32 2131351028, %v52
    %v59 = vor.u32 %v57, %v58
    %v60 = vshll.u32 2131351028, %v51
    %v61 = vshrl.u32 2102212464, %v52
    %v62 = vor.u32 %v60, %v61
    %v63 = vshll.u32 2102212464, %v51
    %v64 = vshrl.u32 920167782, %v52
    %v65 = vor.u32 %v63, %v64
    %v66 = vshll.u32 920167782, %v51
    %v67 = vshrl.u32 1326507024, %v52
    %v68 = vor.u32 %v66, %v67
    %vm69 = vcmp.lt.s32.totalorder %v50, 1
    %vm70 = vcmp.lt.s32.totalorder %v50, 2
    %vm71 = vcmp.lt.s32.totalorder %v50, 3
    %vm72 = vcmp.lt.s32.totalorder %v50, 4
    %v73 = vsel %vm69, %v53, %v56
    %v74 = vsel %vm72, %v62, 2102212464
    %v75 = vsel %vm71, %v59, %v74
    %v76 = vsel %vm70, %v73, %v75
    %v77 = vsel %vm69, %v56, %v59
    %v78 = vsel %vm72, %v65, 920167782
    %v79 = vsel %vm71, %v62, %v78
    %v80 = vsel %vm70, %v77, %v79
    %v81 = vsel %vm69, %v59, %v62
    %v82 = vsel %vm72, %v68, 1326507024
    %v83 = vsel %vm71, %v65, %v82
    %v84 = vsel %vm70, %v81, %v83
    %v85 = vshll.u32 %v45, 8
    %v86 = vmul.u32.u64.compose %v85, %v84
    %v87 = vextract.low.u32 %v86
    %v88 = vextract.high.u32 %v86
    %v89 = vmul.u32.u64.compose %v85, %v80
    %v90 = vextract.low.u32 %v89
    %v91 = vextract.high.u32 %v89
    %v92 = vmul.u32 %v85, %v76
    %v93 = vadd.s32 %v88, %v90
    %vm94 = vc.u32 %v88, %v90
    %v95 = vadd.s32 %v91, 1
    %v96 = vsel %vm94, %v95, %v91
    %v97 = vadd.s32 %v92, %v96
    %v98 = vadd.s32 %v97, 536870912
    %v99 = vshrl.u32 %v98, 30
    %v100 = vshll.u32 %v99, 30
    %v101 = vsub.s32 %v97, %v100
    %vm102 = vcmp.lt.s32.totalorder %v101, 0
    %v103 = vsub.s32 0, %v101
    %v104 = vsel %vm102, %v103, %v101
    %v105 = vclz %v104
    %v106 = vsub.s32 %v105, 2
    %vm107 = vcmp.gt.s32.totalorder 0, %v106
    %v108 = vsel %vm107, 0, %v106
    %v109 = vsub.s32 32, %v108
    %v110 = vshll.u32 %v101, %v108
    %v111 = vshrl.u32 %v93, %v109
    %v112 = vor.u32 %v110, %v111
    %v113 = vsub.s32 4294967266, %v108
    %v114 = vadd.s32 %v113, 127
    %v115 = vshll.u32 %v114, 23
    %v116 = vor.u32 4788187, %v115
    %v117 = vand.u32 2147483647, %v116
    %v119 = vcvt.s32.f32 %v112
    %v120 = vmul.f32 %v119, %v117
    %v121 = vxor.u32 %v120, 2147483648
    %v122 = vsel %vm39, %v121, %v120
    %v123 = vsub.s32 4, %v99
    %v124 = vsel %vm39, %v123, %v99
    %v125 = vsel %vm38, %v36, %v122
    %v126 = vsel %vm38, 0, %v124
    %v127 = vcosq.f32.pop %v125
    %v128 = vsinq.f32.pop %v125
    %vm129 = vweird.f32 %v36
    %v130 = vadd.s32 %v126, 3
    %v131 = vand.u32 %v130, 3
    %vm132 = vcmp.lt.s32.totalorder %v131, 2
    %vm133 = vcmp.eq.s32.totalorder %v131, 0
    %v134 = vxor.u32 %v128, 2147483648
    %v135 = vsel %vm133, %v127, %v134
    %vm136 = vcmp.eq.s32.totalorder %v131, 2
    %v137 = vxor.u32 %v127, 2147483648
    %v138 = vsel %vm136, %v137, %v128
    %v139 = vsel %vm132, %v135, %v138
    %v140 = vsel %vm129, nan, %v139
    %v141 = vadd.f32 %v32, %v24
    %v142 = vand.u32 2147483647, %v141
    %vm143 = vcmp.le.f32.partialorder %v142, 0.7853982
    %vm144 = vcmp.lt.s32.totalorder %v141, 0
    %v145 = vand.u32 %v141, 2139095040
    %v146 = vshrl.u32 %v145, 23
    %v147 = vsub.s32 %v146, 127
    %v148 = vand.u32 2147483647, %v141
    %v149 = vand.u32 %v148, 8388607
    %v150 = vor.u32 %v149, 8388608
    %v151 = vsub.s32 0, %v150
    %v152 = vadd.s32 %v147, 1
    %vm153 = vcmp.gt.s32.totalorder %v152, 0
    %v154 = vsel %vm153, %v152, 0
    %v155 = vshrl.u32 %v154, 5
    %v156 = vand.u32 %v154, 31
    %v157 = vsub.s32 32, %v156
    %v158 = vshrl.u32 683565275, %v157
    %v159 = vshll.u32 683565275, %v156
    %v160 = vshrl.u32 2475754826, %v157
    %v161 = vor.u32 %v159, %v160
    %v162 = vshll.u32 2475754826, %v156
    %v163 = vshrl.u32 2131351028, %v157
    %v164 = vor.u32 %v162, %v163
    %v165 = vshll.u32 2131351028, %v156
    %v166 = vshrl.u32 2102212464, %v157
    %v167 = vor.u32 %v165, %v166
    %v168 = vshll.u32 2102212464, %v156
    %v169 = vshrl.u32 920167782, %v157
    %v170 = vor.u32 %v168, %v169
    %v171 = vshll.u32 920167782, %v156
    %v172 = vshrl.u32 1326507024, %v157
    %v173 = vor.u32 %v171, %v172
    %vm174 = vcmp.lt.s32.totalorder %v155, 1
    %vm175 = vcmp.lt.s32.totalorder %v155, 2
    %vm176 = vcmp.lt.s32.totalorder %v155, 3
    %vm177 = vcmp.lt.s32.totalorder %v155, 4
    %v178 = vsel %vm174, %v158, %v161
    %v179 = vsel %vm177, %v167, 2102212464
    %v180 = vsel %vm176, %v164, %v179
    %v181 = vsel %vm175, %v178, %v180
    %v182 = vsel %vm174, %v161, %v164
    %v183 = vsel %vm177, %v170, 920167782
    %v184 = vsel %vm176, %v167, %v183
    %v185 = vsel %vm175, %v182, %v184
    %v186 = vsel %vm174, %v164, %v167
    %v187 = vsel %vm177, %v173, 1326507024
    %v188 = vsel %vm176, %v170, %v187
    %v189 = vsel %vm175, %v186, %v188
    %v190 = vshll.u32 %v150, 8
    %v191 = vmul.u32.u64.compose %v190, %v189
    %v192 = vextract.low.u32 %v191
    %v193 = vextract.high.u32 %v191
    %v194 = vmul.u32.u64.compose %v190, %v185
    %v195 = vextract.low.u32 %v194
    %v196 = vextract.high.u32 %v194
    %v197 = vmul.u32 %v190, %v181
    %v198 = vadd.s32 %v193, %v195
    %vm199 = vc.u32 %v193, %v195
    %v200 = vadd.s32 %v196, 1
    %v201 = vsel %vm199, %v200, %v196
    %v202 = vadd.s32 %v197, %v201
    %v203 = vadd.s32 %v202, 536870912
    %v204 = vshrl.u32 %v203, 30
    %v205 = vshll.u32 %v204, 30
    %v206 = vsub.s32 %v202, %v205
    %vm207 = vcmp.lt.s32.totalorder %v206, 0
    %v208 = vsub.s32 0, %v206
    %v209 = vsel %vm207, %v208, %v206
    %v210 = vclz %v209
    %v211 = vsub.s32 %v210, 2
    %vm212 = vcmp.gt.s32.totalorder 0, %v211
    %v213 = vsel %vm212, 0, %v211
    %v214 = vsub.s32 32, %v213
    %v215 = vshll.u32 %v206, %v213
    %v216 = vshrl.u32 %v198, %v214
    %v217 = vor.u32 %v215, %v216
    %v218 = vsub.s32 4294967266, %v213
    %v219 = vadd.s32 %v218, 127
    %v220 = vshll.u32 %v219, 23
    %v221 = vor.u32 4788187, %v220
    %v222 = vand.u32 2147483647, %v221
    %v224 = vcvt.s32.f32 %v217
    %v225 = vmul.f32 %v224, %v222
    %v226 = vxor.u32 %v225, 2147483648
    %v227 = vsel %vm144, %v226, %v225
    %v228 = vsub.s32 4, %v204
    %v229 = vsel %vm144, %v228, %v204
    %v230 = vsel %vm143, %v141, %v227
    %v231 = vsel %vm143, 0, %v229
    %v232 = vcosq.f32.pop %v230
    %v233 = vsinq.f32.pop %v230
    %vm234 = vweird.f32 %v141
    %v235 = vadd.s32 %v231, 3
    %v236 = vand.u32 %v235, 3
    %vm237 = vcmp.lt.s32.totalorder %v236, 2
    %vm238 = vcmp.eq.s32.totalorder %v236, 0
    %v239 = vxor.u32 %v233, 2147483648
    %v240 = vsel %vm238, %v232, %v239
    %vm241 = vcmp.eq.s32.totalorder %v236, 2
    %v242 = vxor.u32 %v232, 2147483648
    %v243 = vsel %vm241, %v242, %v233
    %v244 = vsel %vm237, %v240, %v243
    %v245 = vsel %vm234, nan, %v244
    %v247 = vrot.slane %v245, 5
    %v248 = vrot.slane %v247, 4
    %v250 = vadd.f32 %v140, %v248
    %v253 = vunpack.c.l.s4 1966171168
    %v254 = vunpack.c.0.s8 %v253
    %v255 = vlaneseq
    %v256 = vshrl.u32 %v255, 7
    %v257 = vsub.s32 %v254, %v256
    %v258 = vrot.slane %v250, %v257
    %v260 = vunpack.c.l.s4 1966171168
    %v261 = vunpack.c.0.s8 %v260
    %v262 = vlaneseq
    %v263 = vshrl.u32 %v262, 7
    %v264 = vsub.s32 %v261, %v263
    %v265 = vrot.slane %v258, %v264
    %v267 = vlaneseq
    %vm268 = vcmp.ge.s32.totalorder %v267, 0
    %vm269 = vcmp.lt.s32.totalorder %v267, 256
    %vm270 = vmand %vm268, %vm269
    %271 = vst.msk [vmem:[#allocation2] sm:$0x3] %vm270, %v265
    %v272 = vld [vmem:[#allocation2] sm:$0x3]
    %v274 = vlaneseq
    %v275 = vshrl.u32 %v274, 7
    %v276 = vsub.s32 0, %v275
    %v277 = vrot.slane %v272, %v276
    %v278 = vlaneseq
    %v279 = vshrl.u32 %v278, 7
    %v280 = vsub.s32 1, %v279
    %v281 = vrot.slane %v272, %v280
    %284 = vst [vmem:[#allocation6] sm:$0xff] %v277
    %285 = vst [vmem:[#allocation6 + $0x8] sm:$0xff] %v281
    // Predicated region
    $region10: #{tpu_custom_call.1} parent=1 // pred_check
      _
    $region11: #{tpu_custom_call.1} parent=1 // pred_check_branch
      %287 = sbr.rel (0) target = $region13
    $region12: #{tpu_custom_call.1} parent=1 // pred_region
      %s289 = ssub.s32 256, 256
      %290 = vsyncadd [#allocation5], %s289
      %s292 = sshll.u32 [#allocation6], 4
      %s293 = int_to_ptr.vmem [resolvable:$true] %s292
      %295 = dma.vmem_to_hbm [thread:$0]  %s293, 256, %s1, [#allocation5]
    $region13: #{tpu_custom_call.1} parent=1 // pred_fallthru
      _
    // Predicated region
    $region14: #{tpu_custom_call.1} parent=1 // pred_check
      _
    $region15: #{tpu_custom_call.1} parent=1 // pred_check_branch
      %297 = sbr.rel (0) target = $region17
    $region16: #{tpu_custom_call.1} parent=1 // pred_region
      %298 = dma.done [#allocation5], 256
    $region17: #{tpu_custom_call.1} parent=1 // pred_fallthru
      _
    %299 = vsyncpa [#allocation4], 1
    %300 = vsyncpa [#allocation5], 1

</llo_original>
